<compile_context>
chip_gen: v5e
topology: v5e:2x2
jax: 0.10.0
libtpu: 0.0.40
codegen_flags: <defaults>
</compile_context>

<pallas_src>
import functools
import math

import jax
import jax.numpy as jnp
from jax.experimental import pallas as pl
from jax.experimental.pallas import tpu as pltpu


def _attention_kernel(x_ref, wqkv_ref, wo_ref, b_ref, o_ref, *, heads, dim_head):
    inner = heads * dim_head
    scale = 1.0 / math.sqrt(dim_head)

    x = x_ref[0]                                                         # (N, dim)

    # One fused, lane-dense QKV projection: (N, dim) @ (dim, 3*inner).
    qkv = jnp.dot(x, wqkv_ref[...], preferred_element_type=jnp.float32)  # (N, 3*inner)

    # Per-head attention (H is small and static -> fully unrolled).
    head_outs = []
    for h in range(heads):
        lo = h * dim_head
        q = qkv[:, lo:lo + dim_head]                                     # (N, dh)
        k = qkv[:, inner + lo:inner + lo + dim_head]                     # (N, dh)
        v = qkv[:, 2 * inner + lo:2 * inner + lo + dim_head]             # (N, dh)

        # q @ k^T (contract last dims; no explicit transpose needed).
        s = jax.lax.dot_general(q, k, (((1,), (1,)), ((), ())),
                                preferred_element_type=jnp.float32) * scale  # (N, N)
        s = s - jnp.max(s, axis=-1, keepdims=True)
        p = jnp.exp(s)
        p = p * pl.reciprocal(jnp.sum(p, axis=-1, keepdims=True), approx=False)

        head_outs.append(jnp.dot(p, v, preferred_element_type=jnp.float32))  # (N, dh)

    # Fused output projection: (N, inner) @ (inner, out_dim) + bias, one store.
    out_cat = jnp.concatenate(head_outs, axis=-1)                        # (N, inner)
    y = jnp.dot(out_cat, wo_ref[...], preferred_element_type=jnp.float32)
    y = y + b_ref[...].astype(jnp.float32)                               # (N, out_dim)

    o_ref[0] = y.astype(o_ref.dtype)


def attention(x, w_qkv, wo, bo, *, heads, dim_head):
    """Pallas MHA:  softmax((xWq)(xWk)^T / sqrt(dh)) (xWv) Wo + bo.

    x     : (B, N, dim)
    w_qkv : (dim, 3*heads*dim_head)   fused q|k|v projection (to_qkv.weight^T)
    wo    : (heads*dim_head, out_dim) output projection (to_out[0].weight^T)
    bo    : (1, out_dim)              output projection bias
    """
    B, N, dim = x.shape
    inner = heads * dim_head
    out_dim = wo.shape[-1]
    assert w_qkv.shape == (dim, 3 * inner)
    assert wo.shape == (inner, out_dim)

    kernel = functools.partial(_attention_kernel, heads=heads, dim_head=dim_head)

    return pl.pallas_call(
        kernel,
        out_shape=jax.ShapeDtypeStruct((B, N, out_dim), x.dtype),
        grid_spec=pltpu.PrefetchScalarGridSpec(
            num_scalar_prefetch=0,
            grid=(B,),  # one grid step per batch; heads handled in-body
            in_specs=[
                pl.BlockSpec((1, N, dim), lambda b: (b, 0, 0)),
                # Weights: full-extent blocks, constant index_map -> resident in VMEM.
                pl.BlockSpec((dim, 3 * inner), lambda b: (0, 0)),
                pl.BlockSpec((inner, out_dim), lambda b: (0, 0)),
                pl.BlockSpec((1, out_dim), lambda b: (0, 0)),
            ],
            out_specs=pl.BlockSpec((1, N, out_dim), lambda b: (b, 0, 0)),
        ),
        compiler_params=pltpu.CompilerParams(
            dimension_semantics=("parallel",),  # shards batch across TCs on v7x
        ),
    )(x, w_qkv, wo, bo)


def attention_ref(x, w_qkv, wo, bo, *, heads):
    """Pure-JAX reference mirroring the PyTorch module forward."""
    B, N, dim = x.shape
    inner = w_qkv.shape[-1] // 3
    dh = inner // heads
    scale = 1.0 / math.sqrt(dh)

    qkv = x @ w_qkv
    q, k, v = jnp.split(qkv, 3, axis=-1)

    def to_heads(t):
        return t.reshape(B, N, heads, dh).transpose(0, 2, 1, 3)

    q, k, v = map(to_heads, (q, k, v))
    s = jnp.einsum('bhnd,bhmd->bhnm', q, k) * scale
    p = jax.nn.softmax(s, axis=-1)
    o = jnp.einsum('bhnm,bhmd->bhnd', p, v)
    o = o.transpose(0, 2, 1, 3).reshape(B, N, inner)
    return o @ wo + bo


if __name__ == "__main__":
    key = jax.random.PRNGKey(0)
    # Small shapes consistent with the module: batch=2, seq=8, dim=32,
    # heads=4, dim_head=16 -> inner_dim=64, out_dim=dim=32 (project_out=True).
    B, N, dim = 2, 8, 32
    heads, dim_head = 4, 16
    inner = heads * dim_head
    out_dim = dim

    k0, k1, k2, k3 = jax.random.split(key, 4)
    x = jax.random.normal(k0, (B, N, dim), dtype=jnp.float32)

    # to_qkv: Linear(dim, 3*inner, bias=False)  (weight stored transposed: x @ W)
    w_qkv = jax.random.normal(k1, (dim, 3 * inner), dtype=jnp.float32) * (1.0 / math.sqrt(dim))

    # to_out: Linear(inner, out_dim) + Dropout(0.0)
    # TODO(synk): Dropout with p>0 in training mode not implemented; default p=0.0 is identity.
    wo = jax.random.normal(k2, (inner, out_dim), dtype=jnp.float32) * (1.0 / math.sqrt(inner))
    bo = jax.random.normal(k3, (1, out_dim), dtype=jnp.float32) * 0.01

    y = attention(x, w_qkv, wo, bo, heads=heads, dim_head=dim_head)
    jax.block_until_ready(y)

    y_ref = attention_ref(x, w_qkv, wo, bo, heads=heads)
    assert y.shape == (B, N, out_dim) and y.dtype == x.dtype
    max_err = float(jnp.max(jnp.abs(y - y_ref)))
    assert jnp.allclose(y, y_ref, atol=2e-5, rtol=2e-5), f"max abs err {max_err}"
    print("KERNEL_OK")
</pallas_src>

<mosaic_0001>
module attributes {stable_mosaic.version = 11 : i64} {
  func.func @_attention_kernel(%arg0: i32, %arg1: memref<1x8x32xf32, #tpu.memory_space<vmem>>, %arg2: memref<32x192xf32, #tpu.memory_space<vmem>>, %arg3: memref<64x32xf32, #tpu.memory_space<vmem>>, %arg4: memref<1x32xf32, #tpu.memory_space<vmem>>, %arg5: memref<1x8x32xf32, #tpu.memory_space<vmem>>) attributes {dimension_semantics = [#tpu.dimension_semantics<parallel>], iteration_bounds = array<i64: 2>, scalar_prefetch = 0 : i64, scratch_operands = 0 : i64, tpu.core_type = #tpu.core_type<tc>, window_params = [{transform_indices = @transform_0, window_bounds = array<i64: 1, 8, 32>}, {pipeline_mode = #tpu.pipeline_mode<synchronous>, transform_indices = @transform_1, window_bounds = array<i64: 32, 192>}, {pipeline_mode = #tpu.pipeline_mode<synchronous>, transform_indices = @transform_2, window_bounds = array<i64: 64, 32>}, {pipeline_mode = #tpu.pipeline_mode<synchronous>, transform_indices = @transform_3, window_bounds = array<i64: 1, 32>}, {transform_indices = @transform_4, window_bounds = array<i64: 1, 8, 32>}]} {
    %c0 = arith.constant 0 : index
    %c0_0 = arith.constant 0 : index
    %c0_1 = arith.constant 0 : index
    %0 = vector.load %arg1[%c0, %c0_0, %c0_1] : memref<1x8x32xf32, #tpu.memory_space<vmem>>, vector<1x8x32xf32>
    %1 = vector.shape_cast %0 : vector<1x8x32xf32> to vector<8x32xf32>
    %c0_2 = arith.constant 0 : index
    %c0_3 = arith.constant 0 : index
    %2 = vector.load %arg2[%c0_2, %c0_3] : memref<32x192xf32, #tpu.memory_space<vmem>>, vector<32x192xf32>
    %cst = arith.constant dense<0.000000e+00> : vector<8x192xf32>
    %3 = tpu.matmul %1, %2, %cst {dimension_numbers = #tpu.dot_dimension_numbers<[1], [0], [0], [1], [0, 0, 1, 1], [], []>} : vector<8x32xf32>, vector<32x192xf32>, vector<8x192xf32> -> vector<8x192xf32>
    %4 = vector.extract_strided_slice %3 {offsets = [0, 0], sizes = [8, 16], strides = [1, 1]} : vector<8x192xf32> to vector<8x16xf32>
    %5 = vector.extract_strided_slice %3 {offsets = [0, 64], sizes = [8, 16], strides = [1, 1]} : vector<8x192xf32> to vector<8x16xf32>
    %6 = vector.extract_strided_slice %3 {offsets = [0, 128], sizes = [8, 16], strides = [1, 1]} : vector<8x192xf32> to vector<8x16xf32>
    %cst_4 = arith.constant dense<0.000000e+00> : vector<8x8xf32>
    %7 = tpu.matmul %4, %5, %cst_4 {dimension_numbers = #tpu.dot_dimension_numbers<[1], [1], [0], [0], [0, 0, 1, 0], [], []>} : vector<8x16xf32>, vector<8x16xf32>, vector<8x8xf32> -> vector<8x8xf32>
    %cst_5 = arith.constant 2.500000e-01 : f32
    %8 = vector.broadcast %cst_5 : f32 to vector<8x8xf32>
    %9 = arith.mulf %7, %8 : vector<8x8xf32>
    %cst_6 = arith.constant dense<0xFF800000> : vector<8xf32>
    %10 = vector.multi_reduction <maximumf>, %9, %cst_6 [1] : vector<8x8xf32> to vector<8xf32>
    %11 = vector.shape_cast %10 : vector<8xf32> to vector<8x1xf32>
    %12 = vector.broadcast %11 : vector<8x1xf32> to vector<8x8xf32>
    %13 = arith.subf %9, %12 : vector<8x8xf32>
    %14 = math.exp %13 : vector<8x8xf32>
    %cst_7 = arith.constant dense<0.000000e+00> : vector<8xf32>
    %15 = vector.multi_reduction <add>, %14, %cst_7 [1] : vector<8x8xf32> to vector<8xf32>
    %16 = vector.shape_cast %15 : vector<8xf32> to vector<8x1xf32>
    %17 = tpu.reciprocal %16 : vector<8x1xf32> -> vector<8x1xf32>
    %18 = vector.broadcast %17 : vector<8x1xf32> to vector<8x8xf32>
    %19 = arith.mulf %14, %18 : vector<8x8xf32>
    %cst_8 = arith.constant dense<0.000000e+00> : vector<8x16xf32>
    %20 = tpu.matmul %19, %6, %cst_8 {dimension_numbers = #tpu.dot_dimension_numbers<[1], [0], [0], [1], [0, 0, 1, 1], [], []>} : vector<8x8xf32>, vector<8x16xf32>, vector<8x16xf32> -> vector<8x16xf32>
    %21 = vector.extract_strided_slice %3 {offsets = [0, 16], sizes = [8, 16], strides = [1, 1]} : vector<8x192xf32> to vector<8x16xf32>
    %22 = vector.extract_strided_slice %3 {offsets = [0, 80], sizes = [8, 16], strides = [1, 1]} : vector<8x192xf32> to vector<8x16xf32>
    %23 = vector.extract_strided_slice %3 {offsets = [0, 144], sizes = [8, 16], strides = [1, 1]} : vector<8x192xf32> to vector<8x16xf32>
    %cst_9 = arith.constant dense<0.000000e+00> : vector<8x8xf32>
    %24 = tpu.matmul %21, %22, %cst_9 {dimension_numbers = #tpu.dot_dimension_numbers<[1], [1], [0], [0], [0, 0, 1, 0], [], []>} : vector<8x16xf32>, vector<8x16xf32>, vector<8x8xf32> -> vector<8x8xf32>
    %cst_10 = arith.constant 2.500000e-01 : f32
    %25 = vector.broadcast %cst_10 : f32 to vector<8x8xf32>
    %26 = arith.mulf %24, %25 : vector<8x8xf32>
    %cst_11 = arith.constant dense<0xFF800000> : vector<8xf32>
    %27 = vector.multi_reduction <maximumf>, %26, %cst_11 [1] : vector<8x8xf32> to vector<8xf32>
    %28 = vector.shape_cast %27 : vector<8xf32> to vector<8x1xf32>
    %29 = vector.broadcast %28 : vector<8x1xf32> to vector<8x8xf32>
    %30 = arith.subf %26, %29 : vector<8x8xf32>
    %31 = math.exp %30 : vector<8x8xf32>
    %cst_12 = arith.constant dense<0.000000e+00> : vector<8xf32>
    %32 = vector.multi_reduction <add>, %31, %cst_12 [1] : vector<8x8xf32> to vector<8xf32>
    %33 = vector.shape_cast %32 : vector<8xf32> to vector<8x1xf32>
    %34 = tpu.reciprocal %33 : vector<8x1xf32> -> vector<8x1xf32>
    %35 = vector.broadcast %34 : vector<8x1xf32> to vector<8x8xf32>
    %36 = arith.mulf %31, %35 : vector<8x8xf32>
    %cst_13 = arith.constant dense<0.000000e+00> : vector<8x16xf32>
    %37 = tpu.matmul %36, %23, %cst_13 {dimension_numbers = #tpu.dot_dimension_numbers<[1], [0], [0], [1], [0, 0, 1, 1], [], []>} : vector<8x8xf32>, vector<8x16xf32>, vector<8x16xf32> -> vector<8x16xf32>
    %38 = vector.extract_strided_slice %3 {offsets = [0, 32], sizes = [8, 16], strides = [1, 1]} : vector<8x192xf32> to vector<8x16xf32>
    %39 = vector.extract_strided_slice %3 {offsets = [0, 96], sizes = [8, 16], strides = [1, 1]} : vector<8x192xf32> to vector<8x16xf32>
    %40 = vector.extract_strided_slice %3 {offsets = [0, 160], sizes = [8, 16], strides = [1, 1]} : vector<8x192xf32> to vector<8x16xf32>
    %cst_14 = arith.constant dense<0.000000e+00> : vector<8x8xf32>
    %41 = tpu.matmul %38, %39, %cst_14 {dimension_numbers = #tpu.dot_dimension_numbers<[1], [1], [0], [0], [0, 0, 1, 0], [], []>} : vector<8x16xf32>, vector<8x16xf32>, vector<8x8xf32> -> vector<8x8xf32>
    %cst_15 = arith.constant 2.500000e-01 : f32
    %42 = vector.broadcast %cst_15 : f32 to vector<8x8xf32>
    %43 = arith.mulf %41, %42 : vector<8x8xf32>
    %cst_16 = arith.constant dense<0xFF800000> : vector<8xf32>
    %44 = vector.multi_reduction <maximumf>, %43, %cst_16 [1] : vector<8x8xf32> to vector<8xf32>
    %45 = vector.shape_cast %44 : vector<8xf32> to vector<8x1xf32>
    %46 = vector.broadcast %45 : vector<8x1xf32> to vector<8x8xf32>
    %47 = arith.subf %43, %46 : vector<8x8xf32>
    %48 = math.exp %47 : vector<8x8xf32>
    %cst_17 = arith.constant dense<0.000000e+00> : vector<8xf32>
    %49 = vector.multi_reduction <add>, %48, %cst_17 [1] : vector<8x8xf32> to vector<8xf32>
    %50 = vector.shape_cast %49 : vector<8xf32> to vector<8x1xf32>
    %51 = tpu.reciprocal %50 : vector<8x1xf32> -> vector<8x1xf32>
    %52 = vector.broadcast %51 : vector<8x1xf32> to vector<8x8xf32>
    %53 = arith.mulf %48, %52 : vector<8x8xf32>
    %cst_18 = arith.constant dense<0.000000e+00> : vector<8x16xf32>
    %54 = tpu.matmul %53, %40, %cst_18 {dimension_numbers = #tpu.dot_dimension_numbers<[1], [0], [0], [1], [0, 0, 1, 1], [], []>} : vector<8x8xf32>, vector<8x16xf32>, vector<8x16xf32> -> vector<8x16xf32>
    %55 = vector.extract_strided_slice %3 {offsets = [0, 48], sizes = [8, 16], strides = [1, 1]} : vector<8x192xf32> to vector<8x16xf32>
    %56 = vector.extract_strided_slice %3 {offsets = [0, 112], sizes = [8, 16], strides = [1, 1]} : vector<8x192xf32> to vector<8x16xf32>
    %57 = vector.extract_strided_slice %3 {offsets = [0, 176], sizes = [8, 16], strides = [1, 1]} : vector<8x192xf32> to vector<8x16xf32>
    %cst_19 = arith.constant dense<0.000000e+00> : vector<8x8xf32>
    %58 = tpu.matmul %55, %56, %cst_19 {dimension_numbers = #tpu.dot_dimension_numbers<[1], [1], [0], [0], [0, 0, 1, 0], [], []>} : vector<8x16xf32>, vector<8x16xf32>, vector<8x8xf32> -> vector<8x8xf32>
    %cst_20 = arith.constant 2.500000e-01 : f32
    %59 = vector.broadcast %cst_20 : f32 to vector<8x8xf32>
    %60 = arith.mulf %58, %59 : vector<8x8xf32>
    %cst_21 = arith.constant dense<0xFF800000> : vector<8xf32>
    %61 = vector.multi_reduction <maximumf>, %60, %cst_21 [1] : vector<8x8xf32> to vector<8xf32>
    %62 = vector.shape_cast %61 : vector<8xf32> to vector<8x1xf32>
    %63 = vector.broadcast %62 : vector<8x1xf32> to vector<8x8xf32>
    %64 = arith.subf %60, %63 : vector<8x8xf32>
    %65 = math.exp %64 : vector<8x8xf32>
    %cst_22 = arith.constant dense<0.000000e+00> : vector<8xf32>
    %66 = vector.multi_reduction <add>, %65, %cst_22 [1] : vector<8x8xf32> to vector<8xf32>
    %67 = vector.shape_cast %66 : vector<8xf32> to vector<8x1xf32>
    %68 = tpu.reciprocal %67 : vector<8x1xf32> -> vector<8x1xf32>
    %69 = vector.broadcast %68 : vector<8x1xf32> to vector<8x8xf32>
    %70 = arith.mulf %65, %69 : vector<8x8xf32>
    %cst_23 = arith.constant dense<0.000000e+00> : vector<8x16xf32>
    %71 = tpu.matmul %70, %57, %cst_23 {dimension_numbers = #tpu.dot_dimension_numbers<[1], [0], [0], [1], [0, 0, 1, 1], [], []>} : vector<8x8xf32>, vector<8x16xf32>, vector<8x16xf32> -> vector<8x16xf32>
    %72 = tpu.concatenate %20, %37, %54, %71 in 1 : vector<8x16xf32>, vector<8x16xf32>, vector<8x16xf32>, vector<8x16xf32> -> vector<8x64xf32>
    %c0_24 = arith.constant 0 : index
    %c0_25 = arith.constant 0 : index
    %73 = vector.load %arg3[%c0_24, %c0_25] : memref<64x32xf32, #tpu.memory_space<vmem>>, vector<64x32xf32>
    %cst_26 = arith.constant dense<0.000000e+00> : vector<8x32xf32>
    %74 = tpu.matmul %72, %73, %cst_26 {dimension_numbers = #tpu.dot_dimension_numbers<[1], [0], [0], [1], [0, 0, 1, 1], [], []>} : vector<8x64xf32>, vector<64x32xf32>, vector<8x32xf32> -> vector<8x32xf32>
    %c0_27 = arith.constant 0 : index
    %c0_28 = arith.constant 0 : index
    %75 = vector.load %arg4[%c0_27, %c0_28] : memref<1x32xf32, #tpu.memory_space<vmem>>, vector<1x32xf32>
    %76 = vector.broadcast %75 : vector<1x32xf32> to vector<8x32xf32>
    %77 = arith.addf %74, %76 : vector<8x32xf32>
    %c0_29 = arith.constant 0 : index
    %c0_30 = arith.constant 0 : index
    %c0_31 = arith.constant 0 : index
    %78 = vector.load %arg5[%c0_29, %c0_30, %c0_31] : memref<1x8x32xf32, #tpu.memory_space<vmem>>, vector<1x8x32xf32>
    %79 = vector.shape_cast %78 : vector<1x8x32xf32> to vector<8x32xf32>
    %80 = vector.shape_cast %77 : vector<8x32xf32> to vector<1x8x32xf32>
    tpu.vector_store %arg5[%c0_29, %c0_30, %c0_31], %80 {strides = array<i32>} : memref<1x8x32xf32, #tpu.memory_space<vmem>>, vector<1x8x32xf32>,
    return
  }
  func.func @transform_0(%arg0: i32) -> (i32, i32, i32) {
    %c0_i32 = arith.constant 0 : i32
    %c0_i32_0 = arith.constant 0 : i32
    %c0_i32_1 = arith.constant 0 : i32
    return %arg0, %c0_i32, %c0_i32_0 : i32, i32, i32
  }
  func.func @transform_1(%arg0: i32) -> (i32, i32) {
    %c0_i32 = arith.constant 0 : i32
    %c0_i32_0 = arith.constant 0 : i32
    %c0_i32_1 = arith.constant 0 : i32
    return %c0_i32, %c0_i32_0 : i32, i32
  }
  func.func @transform_2(%arg0: i32) -> (i32, i32) {
    %c0_i32 = arith.constant 0 : i32
    %c0_i32_0 = arith.constant 0 : i32
    %c0_i32_1 = arith.constant 0 : i32
    return %c0_i32, %c0_i32_0 : i32, i32
  }
  func.func @transform_3(%arg0: i32) -> (i32, i32) {
    %c0_i32 = arith.constant 0 : i32
    %c0_i32_0 = arith.constant 0 : i32
    %c0_i32_1 = arith.constant 0 : i32
    return %c0_i32, %c0_i32_0 : i32, i32
  }
  func.func @transform_4(%arg0: i32) -> (i32, i32, i32) {
    %c0_i32 = arith.constant 0 : i32
    %c0_i32_0 = arith.constant 0 : i32
    %c0_i32_1 = arith.constant 0 : i32
    return %arg0, %c0_i32, %c0_i32_0 : i32, i32, i32
  }
}

</mosaic_0001>

<llo_original>
// kernel: tpu_custom_call.1
$region0: #{tpu_custom_call.1}
  #allocation0 [shape = 'u32[]', space=smem, size = 0x4, offset = 0x4, fixed_abs, tag = 'smem constant byte address 0x4 - core index']
  #allocation1 [shape = 'u32[72,128]{1,0:T(1,128)}', space=vmem, size = 0x9000, scoped, tag = 'internal scratch']
  %s0 = inlined_call_operand.vmem [shape: f32[2,8,32], index: 0, kind: input, shape index: {}]
  %s1 = inlined_call_operand.vmem [shape: f32[32,192], index: 1, kind: input, shape index: {}]
  %s2 = inlined_call_operand.vmem [shape: f32[64,32], index: 2, kind: input, shape index: {}]
  %s3 = inlined_call_operand.vmem [shape: f32[1,32], index: 3, kind: input, shape index: {}]
  %s4 = inlined_call_operand.hbm [shape: f32[2,8,32], index: 4, kind: output, shape index: {}]
  %s5 = sld [smem:[#allocation0]]
  $region49: #{tpu_custom_call.1} parent=0
    _
  %s7 = ssub.s32 1, %s5
  %s8 = scalar_select 0, %s7, %s5
  $region1: #{tpu_custom_call.1} parent=0
    #allocation2 [shape = 'u8[8192]{0}', space=vmem, size = 0x2000, scoped, tag = 'output window, operand 0']
    #allocation3 [shape = 's32[2]{0}', space=sflag, size = 0x8, scoped, tag = 'scoped memory for tpu_custom_call.1']
    %9 = vsyncpa [#allocation3], 0
    %s10 = scalar_lea.sflag [#allocation3], 1
    %11 = vsyncpa %s10, 0
    loop: start=0, step=1, limit=4
    $region2: #{tpu_custom_call.1} parent=1 // loop_pre_header
      _
    $region3: #{tpu_custom_call.1} parent=1 // loop_header
      %s13 = sphi 0, %s17
      %p14 = scmp.ge.s32.totalorder %s13, 4
      %s23 = sphi 0, %s25
      %s26 = sphi 0, %s23
      %s27 = sphi 0, %s26
      %s43 = sphi 0, %s27
      %s47 = sphi 0, %s47
      %s49 = sphi 0, %s47
      %s50 = sphi 0, %s49
      %s64 = sphi 0, %s50
      %s68 = sphi 0, %s68
      %s70 = sphi 0, %s68
      %s71 = sphi 0, %s70
      %s85 = sphi 0, %s71
      %s89 = sphi 0, %s89
      %s91 = sphi 0, %s89
      %s92 = sphi 0, %s91
      %s106 = sphi 0, %s92
      %s112 = sphi 0, %s114
      %s115 = sphi 0, %s112
      %s116 = sphi 0, %s115
      %s132 = sphi 0, %s116
    $region4: #{tpu_custom_call.1} parent=1 // loop_header_branch
      %16 = sbr.rel (%p14) target = $region8
    $region5: #{tpu_custom_call.1} parent=1 // loop_body
      %s18 = ssub.s32 %s13, 1
      %s19 = ssub.s32 %s13, 2
      %s20 = sadd.s32 %s13, 1
      %s21 = ssub.s32 %s13, %s20
      %p22 = scmp.eq.s32.totalorder %s21, 0
      %s24 = sadd.s32 %s23, 1
      %s25 = scalar_select %p22, %s23, %s24
      %p28 = pneg %p22
      %p29 = scmp.eq.s32.totalorder %s13, 1
      %p30 = por %p28, %p29
      %p31 = scmp.ne.s32.totalorder %s23, %s26
      %p32 = scmp.eq.s32.totalorder %s13, 0
      %p33 = por %p31, %p32
      %p34 = scmp.ne.s32.totalorder %s23, %s26
      %p35 = scmp.eq.s32.totalorder %s18, 1
      %p36 = por %p34, %p35
      %p37 = scmp.ne.s32.totalorder %s26, %s27
      %p38 = scmp.eq.s32.totalorder %s18, 0
      %p39 = por %p37, %p38
      %p40 = scmp.ne.s32.totalorder %s26, %s27
      %p41 = scmp.eq.s32.totalorder %s19, 1
      %p42 = por %p40, %p41
      %p44 = scmp.ne.s32.totalorder %s27, %s43
      %p45 = scmp.eq.s32.totalorder %s19, 0
      %p46 = por %p44, %p45
      %s48 = sadd.s32 %s47, 1
      %p51 = scmp.eq.s32.totalorder %s13, 1
      %p52 = scmp.ne.s32.totalorder %s47, %s49
      %p53 = scmp.eq.s32.totalorder %s13, 0
      %p54 = por %p52, %p53
      %p55 = scmp.ne.s32.totalorder %s47, %s49
      %p56 = scmp.eq.s32.totalorder %s18, 1
      %p57 = por %p55, %p56
      %p58 = scmp.ne.s32.totalorder %s49, %s50
      %p59 = scmp.eq.s32.totalorder %s18, 0
      %p60 = por %p58, %p59
      %p61 = scmp.ne.s32.totalorder %s49, %s50
      %p62 = scmp.eq.s32.totalorder %s19, 1
      %p63 = por %p61, %p62
      %p65 = scmp.ne.s32.totalorder %s50, %s64
      %p66 = scmp.eq.s32.totalorder %s19, 0
      %p67 = por %p65, %p66
      %s69 = sadd.s32 %s68, 1
      %p72 = scmp.eq.s32.totalorder %s13, 1
      %p73 = scmp.ne.s32.totalorder %s68, %s70
      %p74 = scmp.eq.s32.totalorder %s13, 0
      %p75 = por %p73, %p74
      %p76 = scmp.ne.s32.totalorder %s68, %s70
      %p77 = scmp.eq.s32.totalorder %s18, 1
      %p78 = por %p76, %p77
      %p79 = scmp.ne.s32.totalorder %s70, %s71
      %p80 = scmp.eq.s32.totalorder %s18, 0
      %p81 = por %p79, %p80
      %p82 = scmp.ne.s32.totalorder %s70, %s71
      %p83 = scmp.eq.s32.totalorder %s19, 1
      %p84 = por %p82, %p83
      %p86 = scmp.ne.s32.totalorder %s71, %s85
      %p87 = scmp.eq.s32.totalorder %s19, 0
      %p88 = por %p86, %p87
      %s90 = sadd.s32 %s89, 1
      %p93 = scmp.eq.s32.totalorder %s13, 1
      %p94 = scmp.ne.s32.totalorder %s89, %s91
      %p95 = scmp.eq.s32.totalorder %s13, 0
      %p96 = por %p94, %p95
      %p97 = scmp.ne.s32.totalorder %s89, %s91
      %p98 = scmp.eq.s32.totalorder %s18, 1
      %p99 = por %p97, %p98
      %p100 = scmp.ne.s32.totalorder %s91, %s92
      %p101 = scmp.eq.s32.totalorder %s18, 0
      %p102 = por %p100, %p101
      %p103 = scmp.ne.s32.totalorder %s91, %s92
      %p104 = scmp.eq.s32.totalorder %s19, 1
      %p105 = por %p103, %p104
      %p107 = scmp.ne.s32.totalorder %s92, %s106
      %p108 = scmp.eq.s32.totalorder %s19, 0
      %p109 = por %p107, %p108
      %s110 = ssub.s32 %s13, %s20
      %p111 = scmp.eq.s32.totalorder %s110, 0
      %s113 = sadd.s32 %s112, 1
      %s114 = scalar_select %p111, %s112, %s113
      %p117 = pneg %p111
      %p118 = scmp.eq.s32.totalorder %s13, 1
      %p119 = por %p117, %p118
      %p120 = scmp.ne.s32.totalorder %s112, %s115
      %p121 = scmp.eq.s32.totalorder %s13, 0
      %p122 = por %p120, %p121
      %p123 = scmp.ne.s32.totalorder %s112, %s115
      %p124 = scmp.eq.s32.totalorder %s18, 1
      %p125 = por %p123, %p124
      %p126 = scmp.ne.s32.totalorder %s115, %s116
      %p127 = scmp.eq.s32.totalorder %s18, 0
      %p128 = por %p126, %p127
      %p129 = scmp.ne.s32.totalorder %s115, %s116
      %p130 = scmp.eq.s32.totalorder %s19, 1
      %p131 = por %p129, %p130
      %p133 = scmp.ne.s32.totalorder %s116, %s132
      %p134 = scmp.eq.s32.totalorder %s19, 0
      %p135 = por %p133, %p134
      %p136 = scmp.le.s32.totalorder 1, %s13
      %p137 = scmp.lt.s32.totalorder %s13, 3
      %p138 = pnand %p136, %p137
      %p139 = pneg %p138
      // Predicated region
      $region9: #{tpu_custom_call.1} parent=5 // pred_check
        _
      $region10: #{tpu_custom_call.1} parent=5 // pred_check_branch
        %141 = sbr.rel (%p138) target = $region12
      $region11: #{tpu_custom_call.1} parent=5 // pred_region
        %s142 = ssub.s32 %s13, 1
        // Predicated region
        $region13: #{tpu_custom_call.1} parent=11 // pred_check
          %p143 = pneg %p60
        $region14: #{tpu_custom_call.1} parent=11 // pred_check_branch
          %145 = sbr.rel (%p143) target = $region16
        $region15: #{tpu_custom_call.1} parent=11 // pred_region
          _
        $region16: #{tpu_custom_call.1} parent=11 // pred_fallthru
          _
        // Predicated region
        $region17: #{tpu_custom_call.1} parent=11 // pred_check
          %p146 = pneg %p81
        $region18: #{tpu_custom_call.1} parent=11 // pred_check_branch
          %148 = sbr.rel (%p146) target = $region20
        $region19: #{tpu_custom_call.1} parent=11 // pred_region
          _
        $region20: #{tpu_custom_call.1} parent=11 // pred_fallthru
          _
        // Predicated region
        $region21: #{tpu_custom_call.1} parent=11 // pred_check
          %p149 = pneg %p102
        $region22: #{tpu_custom_call.1} parent=11 // pred_check_branch
          %151 = sbr.rel (%p149) target = $region24
        $region23: #{tpu_custom_call.1} parent=11 // pred_region
          _
        $region24: #{tpu_custom_call.1} parent=11 // pred_fallthru
          _
      $region12: #{tpu_custom_call.1} parent=5 // pred_fallthru
        _
      %p152 = scmp.lt.s32.totalorder %s13, 2
      // Predicated region
      $region25: #{tpu_custom_call.1} parent=5 // pred_check
        %p153 = pneg %p152
      $region26: #{tpu_custom_call.1} parent=5 // pred_check_branch
        %155 = sbr.rel (%p153) target = $region28
      $region27: #{tpu_custom_call.1} parent=5 // pred_region
        // Predicated region
        $region29: #{tpu_custom_call.1} parent=27 // pred_check
          %p156 = pneg %p33
        $region30: #{tpu_custom_call.1} parent=27 // pred_check_branch
          %158 = sbr.rel (%p156) target = $region32
        $region31: #{tpu_custom_call.1} parent=27 // pred_region
          %p159 = scmp.lt.s32.totalorder %s13, 1
          %s160 = scalar_select %p159, %s13, 1
          %s161 = smul.addr %s160, 8
          %s162 = scalar_lea.vmem %s0, %s161
        $region32: #{tpu_custom_call.1} parent=27 // pred_fallthru
          _
      $region28: #{tpu_custom_call.1} parent=5 // pred_fallthru
        _
      %p163 = scmp.le.s32.totalorder 1, %s13
      %p164 = scmp.lt.s32.totalorder %s13, 3
      %p165 = pnand %p163, %p164
      %p166 = pneg %p165
      // Predicated region
      $region33: #{tpu_custom_call.1} parent=5 // pred_check
        _
      $region34: #{tpu_custom_call.1} parent=5 // pred_check_branch
        %168 = sbr.rel (%p165) target = $region36
      $region35: #{tpu_custom_call.1} parent=5 // pred_region
        %s169 = ssub.s32 %s13, 1
        %p170 = scmp.lt.s32.totalorder %s18, 1
        %s171 = scalar_select %p170, %s18, 1
        %s172 = smul.addr %s171, 8
        %s173 = scalar_lea.vmem %s0, %s172
        %p174 = pneg %p39
        %p175 = pneg %p36
        %p176 = pneg %p60
        %p177 = pneg %p57
        %p178 = pneg %p81
        %p179 = pneg %p78
        %p180 = pneg %p102
        %p181 = pneg %p99
        %p182 = pneg %p128
        %p183 = pneg %p125
        %s184 = sand.u32 %s115, 1
        %s185 = scalar_lea.sflag [#allocation3], %s184
        %s186 = sand.u32 %s115, 1
        %s187 = smul.addr %s186, 8
        %s188 = scalar_lea.vmem [#allocation2], %s187
        %p189 = scmp.lt.s32.totalorder %s18, 1
        %s190 = scalar_select %p189, %s18, 1
        %s191 = smul.addr %s190, 8
        %s192 = scalar_lea.vmem %s0, %s191
        %v193 = vld [vmem:[%s192] sm:$0xff]
        %v194 = vld [vmem:[%s1] sm:$0xff]
        %v195 = vld [vmem:[%s1 + $0x8] sm:$0xff]
        %v196 = vld [vmem:[%s1 + $0x10] sm:$0xff]
        %v197 = vld [vmem:[%s1 + $0x18] sm:$0xff]
        %v198 = vld [vmem:[%s1 + $0x20] sm:$0xff]
        %v199 = vld [vmem:[%s1 + $0x28] sm:$0xff]
        %v200 = vld [vmem:[%s1 + $0x30] sm:$0xff]
        %v201 = vld [vmem:[%s1 + $0x38] sm:$0xff]
        %vm202 = vcmask 261120
        %v204 = vsel %vm202, %v193, 0
        %206 = vmatpush.msra.mxu0 0.0
        %207 = vmatpush.msra.mxu0 0.0
        %208 = vmatpush.msra.mxu0 0.0
        %209 = vmatpush.msra.mxu0 0.0
        %210 = vmatpush.msra.mxu0 0.0
        %211 = vmatpush.msra.mxu0 0.0
        %212 = vmatpush.msra.mxu0 0.0
        %213 = vmatpush.msra.mxu0 0.0
        %214 = vmatpush.msra.mxu0 0.0
        %215 = vmatpush.msra.mxu0 0.0
        %216 = vmatpush.msra.mxu0 0.0
        %217 = vmatpush.msra.mxu0 0.0
        %218 = vmatpush.msra.mxu0 %v200
        %219 = vmatpush.msra.mxu0 %v198
        %220 = vmatpush.msra.mxu0 %v196
        %221 = vmatpush.msra.mxu0 %v194
        %222 = vmatmul.f32.gmra.mxu0 %v204
        %v223 = vpop.f32.mrf.mxu0
        %v224 = vadd.f32 0.0, %v223
        %225 = vdwg.mxu0
        %226 = vmatpush.msra.mxu0 0.0
        %227 = vmatpush.msra.mxu0 0.0
        %228 = vmatpush.msra.mxu0 0.0
        %229 = vmatpush.msra.mxu0 0.0
        %230 = vmatpush.msra.mxu0 0.0
        %231 = vmatpush.msra.mxu0 0.0
        %232 = vmatpush.msra.mxu0 0.0
        %233 = vmatpush.msra.mxu0 0.0
        %234 = vmatpush.msra.mxu0 0.0
        %235 = vmatpush.msra.mxu0 0.0
        %236 = vmatpush.msra.mxu0 0.0
        %237 = vmatpush.msra.mxu0 0.0
        %238 = vmatpush.msra.mxu0 %v201
        %239 = vmatpush.msra.mxu0 %v199
        %240 = vmatpush.msra.mxu0 %v197
        %241 = vmatpush.msra.mxu0 %v195
        %242 = vmatmul.f32.gmra.mxu0 %v204
        %v243 = vpop.f32.mrf.mxu0
        %v244 = vadd.f32 0.0, %v243
        %245 = vdwg.mxu0
        %247 = vrot.lane.b32.xlu0 %v224, 64
        %v248 = vpop.permute.xlu0 %247
        %vm249 = vcmask 130048
        %v250 = vsel %vm249, %v224, 0
        %v252 = vsel %vm249, %v248, 0
        %254 = vmatpush.xpose.msra.mxu0 0.0
        %255 = vmatpush.xpose.msra.mxu0 0.0
        %256 = vmatpush.xpose.msra.mxu0 0.0
        %257 = vmatpush.xpose.msra.mxu0 0.0
        %258 = vmatpush.xpose.msra.mxu0 0.0
        %259 = vmatpush.xpose.msra.mxu0 0.0
        %260 = vmatpush.xpose.msra.mxu0 0.0
        %261 = vmatpush.xpose.msra.mxu0 0.0
        %262 = vmatpush.xpose.msra.mxu0 0.0
        %263 = vmatpush.xpose.msra.mxu0 0.0
        %264 = vmatpush.xpose.msra.mxu0 0.0
        %265 = vmatpush.xpose.msra.mxu0 0.0
        %266 = vmatpush.xpose.msra.mxu0 0.0
        %267 = vmatpush.xpose.msra.mxu0 0.0
        %268 = vmatpush.xpose.msra.mxu0 0.0
        %269 = vmatpush.xpose.msra.mxu0 %v252
        %270 = vmatmul.f32.gmra.mxu0 %v250
        %v271 = vpop.f32.mrf.mxu0
        %v272 = vadd.f32 0.0, %v271
        %273 = vdwg.mxu0
        %v274 = vmul.f32 %v272, 0.25
        %vm275 = vcmask 64512
        %v276 = vsel %vm275, %v274, -inf
        %277 = vmax.xlane.f32.xlu0 %v276
        %v278 = vpop.xlane.xlu0 %277
        %v279 = vsub.f32 %v274, %v278
        %v280 = vmul.f32 %v279, 1.442695
        %v281 = vpow.pop %v280
        %v282 = vsel %vm275, %v281, 0.0
        %283 = vadd.xlane.f32.xlu0 %v282
        %v284 = vpop.xlane.xlu0 %283
        %v285 = vrcp.pop %v284
        %v286 = vmul.f32 %v284, %v285
        %v287 = vsub.f32 1.0, %v286
        %v288 = vmul.f32 %v285, %v287
        %v289 = vadd.f32 %v285, %v288
        %vm290 = vweird.f32 %v284
        %vm291 = vweird.f32 %v285
        %vm292 = vmor %vm290, %vm291
        %v293 = vsel %vm292, %v285, %v289
        %v294 = vand.u32 2147483647, %v284
        %vm295 = vcmp.eq.f32.partialorder %v294, 8.507059e+37
        %v296 = vand.u32 %v284, 2147483648
        %v297 = vor.u32 1.1754944e-38, %v296
        %v298 = vsel %vm295, %v297, %v293
        %v299 = vmul.f32 %v281, %v298
        %v301 = vsel %vm275, %v299, 0
        %303 = vmatpush.msra.mxu0 0.0
        %304 = vmatpush.msra.mxu0 0.0
        %305 = vmatpush.msra.mxu0 0.0
        %306 = vmatpush.msra.mxu0 0.0
        %307 = vmatpush.msra.mxu0 0.0
        %308 = vmatpush.msra.mxu0 0.0
        %309 = vmatpush.msra.mxu0 0.0
        %310 = vmatpush.msra.mxu0 0.0
        %311 = vmatpush.msra.mxu0 0.0
        %312 = vmatpush.msra.mxu0 0.0
        %313 = vmatpush.msra.mxu0 0.0
        %314 = vmatpush.msra.mxu0 0.0
        %315 = vmatpush.msra.mxu0 0.0
        %316 = vmatpush.msra.mxu0 0.0
        %317 = vmatpush.msra.mxu0 0.0
        %318 = vmatpush.msra.mxu0 %v244
        %319 = vmatmul.f32.gmra.mxu0 %v301
        %v320 = vpop.f32.mrf.mxu0
        %v321 = vadd.f32 0.0, %v320
        %322 = vdwg.mxu0
        %323 = vrot.lane.b32.xlu0 %v224, 112
        %v324 = vpop.permute.xlu0 %323
        %325 = vrot.lane.b32.xlu0 %v224, 48
        %v326 = vpop.permute.xlu0 %325
        %v327 = vsel %vm249, %v324, 0
        %v329 = vsel %vm249, %v326, 0
        %331 = vmatpush.xpose.msra.mxu0 0.0
        %332 = vmatpush.xpose.msra.mxu0 0.0
        %333 = vmatpush.xpose.msra.mxu0 0.0
        %334 = vmatpush.xpose.msra.mxu0 0.0
        %335 = vmatpush.xpose.msra.mxu0 0.0
        %336 = vmatpush.xpose.msra.mxu0 0.0
        %337 = vmatpush.xpose.msra.mxu0 0.0
        %338 = vmatpush.xpose.msra.mxu0 0.0
        %339 = vmatpush.xpose.msra.mxu0 0.0
        %340 = vmatpush.xpose.msra.mxu0 0.0
        %341 = vmatpush.xpose.msra.mxu0 0.0
        %342 = vmatpush.xpose.msra.mxu0 0.0
        %343 = vmatpush.xpose.msra.mxu0 0.0
        %344 = vmatpush.xpose.msra.mxu0 0.0
        %345 = vmatpush.xpose.msra.mxu0 0.0
        %346 = vmatpush.xpose.msra.mxu0 %v329
        %347 = vmatmul.f32.gmra.mxu0 %v327
        %v348 = vpop.f32.mrf.mxu0
        %v349 = vadd.f32 0.0, %v348
        %350 = vdwg.mxu0
        %v351 = vmul.f32 %v349, 0.25
        %v352 = vsel %vm275, %v351, -inf
        %353 = vmax.xlane.f32.xlu0 %v352
        %v354 = vpop.xlane.xlu0 %353
        %v355 = vsub.f32 %v351, %v354
        %v356 = vmul.f32 %v355, 1.442695
        %v357 = vpow.pop %v356
        %v358 = vsel %vm275, %v357, 0.0
        %359 = vadd.xlane.f32.xlu0 %v358
        %v360 = vpop.xlane.xlu0 %359
        %v361 = vrcp.pop %v360
        %v362 = vmul.f32 %v360, %v361
        %v363 = vsub.f32 1.0, %v362
        %v364 = vmul.f32 %v361, %v363
        %v365 = vadd.f32 %v361, %v364
        %vm366 = vweird.f32 %v360
        %vm367 = vweird.f32 %v361
        %vm368 = vmor %vm366, %vm367
        %v369 = vsel %vm368, %v361, %v365
        %v370 = vand.u32 2147483647, %v360
        %vm371 = vcmp.eq.f32.partialorder %v370, 8.507059e+37
        %v372 = vand.u32 %v360, 2147483648
        %v373 = vor.u32 1.1754944e-38, %v372
        %v374 = vsel %vm371, %v373, %v369
        %v375 = vmul.f32 %v357, %v374
        %377 = vrot.lane.b32.xlu0 %v244, 112
        %v378 = vpop.permute.xlu0 %377
        %v381 = vsel %vm275, %v375, 0
        %383 = vmatpush.msra.mxu0 0.0
        %384 = vmatpush.msra.mxu0 0.0
        %385 = vmatpush.msra.mxu0 0.0
        %386 = vmatpush.msra.mxu0 0.0
        %387 = vmatpush.msra.mxu0 0.0
        %388 = vmatpush.msra.mxu0 0.0
        %389 = vmatpush.msra.mxu0 0.0
        %390 = vmatpush.msra.mxu0 0.0
        %391 = vmatpush.msra.mxu0 0.0
        %392 = vmatpush.msra.mxu0 0.0
        %393 = vmatpush.msra.mxu0 0.0
        %394 = vmatpush.msra.mxu0 0.0
        %395 = vmatpush.msra.mxu0 0.0
        %396 = vmatpush.msra.mxu0 0.0
        %397 = vmatpush.msra.mxu0 0.0
        %398 = vmatpush.msra.mxu0 %v378
        %399 = vmatmul.f32.gmra.mxu0 %v381
        %v400 = vpop.f32.mrf.mxu0
        %v401 = vadd.f32 0.0, %v400
        %402 = vdwg.mxu0
        %403 = vrot.lane.b32.xlu0 %v224, 96
        %v404 = vpop.permute.xlu0 %403
        %405 = vrot.lane.b32.xlu0 %v224, 32
        %v406 = vpop.permute.xlu0 %405
        %v407 = vsel %vm249, %v404, 0
        %v409 = vsel %vm249, %v406, 0
        %411 = vmatpush.xpose.msra.mxu0 0.0
        %412 = vmatpush.xpose.msra.mxu0 0.0
        %413 = vmatpush.xpose.msra.mxu0 0.0
        %414 = vmatpush.xpose.msra.mxu0 0.0
        %415 = vmatpush.xpose.msra.mxu0 0.0
        %416 = vmatpush.xpose.msra.mxu0 0.0
        %417 = vmatpush.xpose.msra.mxu0 0.0
        %418 = vmatpush.xpose.msra.mxu0 0.0
        %419 = vmatpush.xpose.msra.mxu0 0.0
        %420 = vmatpush.xpose.msra.mxu0 0.0
        %421 = vmatpush.xpose.msra.mxu0 0.0
        %422 = vmatpush.xpose.msra.mxu0 0.0
        %423 = vmatpush.xpose.msra.mxu0 0.0
        %424 = vmatpush.xpose.msra.mxu0 0.0
        %425 = vmatpush.xpose.msra.mxu0 0.0
        %426 = vmatpush.xpose.msra.mxu0 %v409
        %427 = vmatmul.f32.gmra.mxu0 %v407
        %v428 = vpop.f32.mrf.mxu0
        %v429 = vadd.f32 0.0, %v428
        %430 = vdwg.mxu0
        %v431 = vmul.f32 %v429, 0.25
        %v432 = vsel %vm275, %v431, -inf
        %433 = vmax.xlane.f32.xlu0 %v432
        %v434 = vpop.xlane.xlu0 %433
        %v435 = vsub.f32 %v431, %v434
        %v436 = vmul.f32 %v435, 1.442695
        %v437 = vpow.pop %v436
        %v438 = vsel %vm275, %v437, 0.0
        %439 = vadd.xlane.f32.xlu0 %v438
        %v440 = vpop.xlane.xlu0 %439
        %v441 = vrcp.pop %v440
        %v442 = vmul.f32 %v440, %v441
        %v443 = vsub.f32 1.0, %v442
        %v444 = vmul.f32 %v441, %v443
        %v445 = vadd.f32 %v441, %v444
        %vm446 = vweird.f32 %v440
        %vm447 = vweird.f32 %v441
        %vm448 = vmor %vm446, %vm447
        %v449 = vsel %vm448, %v441, %v445
        %v450 = vand.u32 2147483647, %v440
        %vm451 = vcmp.eq.f32.partialorder %v450, 8.507059e+37
        %v452 = vand.u32 %v440, 2147483648
        %v453 = vor.u32 1.1754944e-38, %v452
        %v454 = vsel %vm451, %v453, %v449
        %v455 = vmul.f32 %v437, %v454
        %456 = vrot.lane.b32.xlu0 %v244, 96
        %v457 = vpop.permute.xlu0 %456
        %v460 = vsel %vm275, %v455, 0
        %462 = vmatpush.msra.mxu0 0.0
        %463 = vmatpush.msra.mxu0 0.0
        %464 = vmatpush.msra.mxu0 0.0
        %465 = vmatpush.msra.mxu0 0.0
        %466 = vmatpush.msra.mxu0 0.0
        %467 = vmatpush.msra.mxu0 0.0
        %468 = vmatpush.msra.mxu0 0.0
        %469 = vmatpush.msra.mxu0 0.0
        %470 = vmatpush.msra.mxu0 0.0
        %471 = vmatpush.msra.mxu0 0.0
        %472 = vmatpush.msra.mxu0 0.0
        %473 = vmatpush.msra.mxu0 0.0
        %474 = vmatpush.msra.mxu0 0.0
        %475 = vmatpush.msra.mxu0 0.0
        %476 = vmatpush.msra.mxu0 0.0
        %477 = vmatpush.msra.mxu0 %v457
        %478 = vmatmul.f32.gmra.mxu0 %v460
        %v479 = vpop.f32.mrf.mxu0
        %v480 = vadd.f32 0.0, %v479
        %481 = vdwg.mxu0
        %482 = vrot.lane.b32.xlu0 %v224, 80
        %v483 = vpop.permute.xlu0 %482
        %484 = vrot.lane.b32.xlu0 %v224, 16
        %v485 = vpop.permute.xlu0 %484
        %v486 = vsel %vm249, %v483, 0
        %v488 = vsel %vm249, %v485, 0
        %490 = vmatpush.xpose.msra.mxu0 0.0
        %491 = vmatpush.xpose.msra.mxu0 0.0
        %492 = vmatpush.xpose.msra.mxu0 0.0
        %493 = vmatpush.xpose.msra.mxu0 0.0
        %494 = vmatpush.xpose.msra.mxu0 0.0
        %495 = vmatpush.xpose.msra.mxu0 0.0
        %496 = vmatpush.xpose.msra.mxu0 0.0
        %497 = vmatpush.xpose.msra.mxu0 0.0
        %498 = vmatpush.xpose.msra.mxu0 0.0
        %499 = vmatpush.xpose.msra.mxu0 0.0
        %500 = vmatpush.xpose.msra.mxu0 0.0
        %501 = vmatpush.xpose.msra.mxu0 0.0
        %502 = vmatpush.xpose.msra.mxu0 0.0
        %503 = vmatpush.xpose.msra.mxu0 0.0
        %504 = vmatpush.xpose.msra.mxu0 0.0
        %505 = vmatpush.xpose.msra.mxu0 %v488
        %506 = vmatmul.f32.gmra.mxu0 %v486
        %v507 = vpop.f32.mrf.mxu0
        %v508 = vadd.f32 0.0, %v507
        %509 = vdwg.mxu0
        %v510 = vmul.f32 %v508, 0.25
        %v511 = vsel %vm275, %v510, -inf
        %512 = vmax.xlane.f32.xlu0 %v511
        %v513 = vpop.xlane.xlu0 %512
        %v514 = vsub.f32 %v510, %v513
        %v515 = vmul.f32 %v514, 1.442695
        %v516 = vpow.pop %v515
        %v517 = vsel %vm275, %v516, 0.0
        %518 = vadd.xlane.f32.xlu0 %v517
        %v519 = vpop.xlane.xlu0 %518
        %v520 = vrcp.pop %v519
        %v521 = vmul.f32 %v519, %v520
        %v522 = vsub.f32 1.0, %v521
        %v523 = vmul.f32 %v520, %v522
        %v524 = vadd.f32 %v520, %v523
        %vm525 = vweird.f32 %v519
        %vm526 = vweird.f32 %v520
        %vm527 = vmor %vm525, %vm526
        %v528 = vsel %vm527, %v520, %v524
        %v529 = vand.u32 2147483647, %v519
        %vm530 = vcmp.eq.f32.partialorder %v529, 8.507059e+37
        %v531 = vand.u32 %v519, 2147483648
        %v532 = vor.u32 1.1754944e-38, %v531
        %v533 = vsel %vm530, %v532, %v528
        %v534 = vmul.f32 %v516, %v533
        %535 = vrot.lane.b32.xlu0 %v244, 80
        %v536 = vpop.permute.xlu0 %535
        %v539 = vsel %vm275, %v534, 0
        %541 = vmatpush.msra.mxu0 0.0
        %542 = vmatpush.msra.mxu0 0.0
        %543 = vmatpush.msra.mxu0 0.0
        %544 = vmatpush.msra.mxu0 0.0
        %545 = vmatpush.msra.mxu0 0.0
        %546 = vmatpush.msra.mxu0 0.0
        %547 = vmatpush.msra.mxu0 0.0
        %548 = vmatpush.msra.mxu0 0.0
        %549 = vmatpush.msra.mxu0 0.0
        %550 = vmatpush.msra.mxu0 0.0
        %551 = vmatpush.msra.mxu0 0.0
        %552 = vmatpush.msra.mxu0 0.0
        %553 = vmatpush.msra.mxu0 0.0
        %554 = vmatpush.msra.mxu0 0.0
        %555 = vmatpush.msra.mxu0 0.0
        %556 = vmatpush.msra.mxu0 %v536
        %557 = vmatmul.f32.gmra.mxu0 %v539
        %v558 = vpop.f32.mrf.mxu0
        %v559 = vadd.f32 0.0, %v558
        %560 = vdwg.mxu0
        %562 = vrot.lane.b32.xlu0 %v401, 16
        %v563 = vpop.permute.xlu0 %562
        %566 = vrot.lane.b32.xlu0 %v480, 32
        %v567 = vpop.permute.xlu0 %566
        %570 = vrot.lane.b32.xlu0 %v559, 48
        %v571 = vpop.permute.xlu0 %570
        %v573 = vsel %vm249, %v321, %v563
        %v574 = vsel %vm202, %v573, %v567
        %vm575 = vcmask 392192
        %v576 = vsel %vm575, %v574, %v571
        %v577 = vld [vmem:[%s2] sm:$0xff]
        %v578 = vld [vmem:[%s2 + $0x8] sm:$0xff]
        %v579 = vld [vmem:[%s2 + $0x10] sm:$0xff]
        %v580 = vld [vmem:[%s2 + $0x18] sm:$0xff]
        %v581 = vld [vmem:[%s2 + $0x20] sm:$0xff]
        %v582 = vld [vmem:[%s2 + $0x28] sm:$0xff]
        %v583 = vld [vmem:[%s2 + $0x30] sm:$0xff]
        %v584 = vld [vmem:[%s2 + $0x38] sm:$0xff]
        %v585 = vld [vmem:[%s3] sm:$0x1]
        %v587 = vperm.slane %v585, 0
        %vm589 = vcmask 523264
        %v591 = vsel %vm589, %v576, 0
        %593 = vmatpush.msra.mxu0 0.0
        %594 = vmatpush.msra.mxu0 0.0
        %595 = vmatpush.msra.mxu0 0.0
        %596 = vmatpush.msra.mxu0 0.0
        %597 = vmatpush.msra.mxu0 0.0
        %598 = vmatpush.msra.mxu0 0.0
        %599 = vmatpush.msra.mxu0 0.0
        %600 = vmatpush.msra.mxu0 0.0
        %601 = vmatpush.msra.mxu0 %v584
        %602 = vmatpush.msra.mxu0 %v583
        %603 = vmatpush.msra.mxu0 %v582
        %604 = vmatpush.msra.mxu0 %v581
        %605 = vmatpush.msra.mxu0 %v580
        %606 = vmatpush.msra.mxu0 %v579
        %607 = vmatpush.msra.mxu0 %v578
        %608 = vmatpush.msra.mxu0 %v577
        %609 = vmatmul.f32.gmra.mxu0 %v591
        %v610 = vpop.f32.mrf.mxu0
        %v611 = vadd.f32 %v587, %v610
        %612 = vdwg.mxu0
        %613 = vst.msk [vmem:[%s188] sm:$0xff] %vm202, %v611
        %s614 = sand.u32 %s115, 1
        %s615 = scalar_lea.sflag [#allocation3], %s614
        %s616 = sand.u32 %s115, 1
        %s617 = smul.addr %s616, 8
        %s618 = scalar_lea.vmem [#allocation2], %s617
        // Predicated region
        $region37: #{tpu_custom_call.1} parent=35 // pred_check
          %p619 = pneg %p125
        $region38: #{tpu_custom_call.1} parent=35 // pred_check_branch
          %621 = sbr.rel (%p619) target = $region40
        $region39: #{tpu_custom_call.1} parent=35 // pred_region
          %623 = vsyncadd %s615, 0
          %s624 = smul.addr %s18, 8
          %s625 = scalar_lea.hbm %s4, %s624
          %s627 = sshll.u32 %s618, 4
          %s628 = int_to_ptr.vmem [resolvable:$true] %s627
          %s629 = sshll.u32 %s625, 4
          %s630 = int_to_ptr.hbm [resolvable:$true] %s629
          %632 = dma.vmem_to_hbm [thread:$0]  %s628, 128, %s630, %s615
        $region40: #{tpu_custom_call.1} parent=35 // pred_fallthru
          _
      $region36: #{tpu_custom_call.1} parent=5 // pred_fallthru
        _
      %p633 = scmp.le.s32.totalorder 2, %s13
      // Predicated region
      $region41: #{tpu_custom_call.1} parent=5 // pred_check
        %p634 = pneg %p633
      $region42: #{tpu_custom_call.1} parent=5 // pred_check_branch
        %636 = sbr.rel (%p634) target = $region44
      $region43: #{tpu_custom_call.1} parent=5 // pred_region
        %s637 = ssub.s32 %s13, 2
        // Predicated region
        $region45: #{tpu_custom_call.1} parent=43 // pred_check
          %p638 = pneg %p131
        $region46: #{tpu_custom_call.1} parent=43 // pred_check_branch
          %640 = sbr.rel (%p638) target = $region48
        $region47: #{tpu_custom_call.1} parent=43 // pred_region
          %s641 = sand.u32 %s116, 1
          %s642 = scalar_lea.sflag [#allocation3], %s641
          %s643 = sand.u32 %s116, 1
          %s644 = smul.addr %s643, 8
          %s645 = scalar_lea.vmem [#allocation2], %s644
          %647 = dma.done %s642, 128
        $region48: #{tpu_custom_call.1} parent=43 // pred_fallthru
          _
      $region44: #{tpu_custom_call.1} parent=5 // pred_fallthru
        _
    $region6: #{tpu_custom_call.1} parent=1 // loop_footer
      %s17 = sadd.s32 1, %s13
    $region7: #{tpu_custom_call.1} parent=1 // loop_footer_branch
      %12 = sbr.rel target = $region3
    $region8: #{tpu_custom_call.1} parent=1 // loop_exit
      _
    %648 = vsyncpa [#allocation3], 1
    %s649 = scalar_lea.sflag [#allocation3], 1
    %650 = vsyncpa %s649, 1

</llo_original>
